<compile_context>
chip_gen: v6e
topology: v6e:2x2x1
jax: 0.10.0
libtpu: 0.0.40
codegen_flags: <defaults>
</compile_context>

<pallas_src>
import jax
import jax.numpy as jnp
from jax.experimental import pallas as pl
from jax.experimental.pallas import tpu as pltpu


def _round_up(x, m):
    return ((x + m - 1) // m) * m


def mlp_kernel(x_ref, w1_ref, b1_ref, w2_ref, b2_ref, alpha_ref, o_ref):
    # First linear: [bm, in_p] (bf16) @ [in_p, hid_p] (bf16) -> f32 accumulate.
    h = jnp.dot(x_ref[...], w1_ref[...], preferred_element_type=jnp.float32)
    h = h + b1_ref[...]
    # PReLU with a single shared slope (scalar read from SMEM).
    a = alpha_ref[0]
    h = jnp.where(h >= 0, h, a * h)
    # Second linear: cast the f32 intermediate to the MXU dtype, accumulate f32.
    y = jnp.dot(h.astype(w2_ref.dtype), w2_ref[...],
                preferred_element_type=jnp.float32)
    y = y + b2_ref[...]
    o_ref[...] = y.astype(o_ref.dtype)


def _choose_block_m(B):
    # >= 2 grid steps when B allows (v7x megacore), multiple of 8 (f32
    # sublane), capped at 512 rows so x/h/out tiles stay well inside VMEM.
    bm = min(512, _round_up(pl.cdiv(B, 2), 8))
    return min(bm, _round_up(B, 8))


def mlp_forward(x, w1, b1, w2, b2, alpha, *, block_m=None,
                compute_dtype=jnp.bfloat16):
    """x: [B, in]; w1: [hidden, in]; b1: [hidden]; w2: [out, hidden];
    b2: [out]; alpha: scalar PReLU slope. Returns [B, out] in x.dtype."""
    B, in_size = x.shape
    hidden = w1.shape[0]
    out_size = w2.shape[0]
    out_dtype = x.dtype

    if block_m is None:
        block_m = _choose_block_m(B)

    # Lane-dense / MXU-aligned padding (zeros are inert for the math).
    in_p = _round_up(in_size, 128)
    hid_p = _round_up(hidden, 128)
    out_p = _round_up(out_size, 128)
    b_p = _round_up(B, block_m)

    xp = jnp.zeros((b_p, in_p), compute_dtype).at[:B, :in_size].set(
        x.astype(compute_dtype))
    w1_t = jnp.zeros((in_p, hid_p), compute_dtype).at[:in_size, :hidden].set(
        w1.T.astype(compute_dtype))
    w2_t = jnp.zeros((hid_p, out_p), compute_dtype).at[:hidden, :out_size].set(
        w2.T.astype(compute_dtype))
    b1_2d = jnp.zeros((1, hid_p), jnp.float32).at[0, :hidden].set(
        b1.astype(jnp.float32))
    b2_2d = jnp.zeros((1, out_p), jnp.float32).at[0, :out_size].set(
        b2.astype(jnp.float32))
    alpha_1d = jnp.asarray(alpha, jnp.float32).reshape(1)

    grid = (b_p // block_m,)

    # Rough VMEM budget: double-buffered inputs/outputs + the f32 h tile.
    est = 2 * (2 * block_m * in_p                       # x tile (bf16)
               + w1_t.size * 2 + w2_t.size * 2          # weights (bf16)
               + (hid_p + out_p) * 4                    # biases (f32)
               + 4 * block_m * out_p)                   # out tile (f32)
    est += 4 * block_m * hid_p                          # h intermediate (f32)
    vmem_limit = int(min(64 * 1024 * 1024,
                         max(32 * 1024 * 1024, int(est * 1.5))))

    out_padded = pl.pallas_call(
        mlp_kernel,
        out_shape=jax.ShapeDtypeStruct((b_p, out_p), out_dtype),
        grid_spec=pltpu.PrefetchScalarGridSpec(
            num_scalar_prefetch=0,
            grid=grid,
            in_specs=[
                pl.BlockSpec((block_m, in_p), lambda i: (i, 0)),    # x tile
                pl.BlockSpec((in_p, hid_p), lambda i: (0, 0)),      # W1^T
                pl.BlockSpec((1, hid_p), lambda i: (0, 0)),         # b1
                pl.BlockSpec((hid_p, out_p), lambda i: (0, 0)),     # W2^T
                pl.BlockSpec((1, out_p), lambda i: (0, 0)),         # b2
                pl.BlockSpec(memory_space=pltpu.MemorySpace.SMEM),  # alpha
            ],
            out_specs=pl.BlockSpec((block_m, out_p), lambda i: (i, 0)),
        ),
        compiler_params=pltpu.CompilerParams(
            dimension_semantics=("parallel",),
            vmem_limit_bytes=vmem_limit),
    )(xp, w1_t, b1_2d, w2_t, b2_2d, alpha_1d)

    return out_padded[:B, :out_size]


def init_params(key, in_size, hidden_size, out_size):
    """Deterministic init mirroring torch.nn.Linear's kaiming-uniform scheme."""
    k1, k2, k3, k4 = jax.random.split(key, 4)
    bound1 = 1.0 / jnp.sqrt(in_size)
    w1 = jax.random.uniform(k1, (hidden_size, in_size), jnp.float32,
                            -bound1, bound1)
    b1 = jax.random.uniform(k2, (hidden_size,), jnp.float32, -bound1, bound1)
    bound2 = 1.0 / jnp.sqrt(hidden_size)
    w2 = jax.random.uniform(k3, (out_size, hidden_size), jnp.float32,
                            -bound2, bound2)
    b2 = jax.random.uniform(k4, (out_size,), jnp.float32, -bound2, bound2)
    alpha = jnp.float32(0.25)  # torch PReLU default init
    return w1, b1, w2, b2, alpha


def mlp_reference(x, w1, b1, w2, b2, alpha, compute_dtype=jnp.bfloat16):
    """Reference with the same bf16-in / f32-accumulate precision as the kernel."""
    xc = x.astype(compute_dtype)
    h = jnp.dot(xc, w1.astype(compute_dtype).T,
                preferred_element_type=jnp.float32) + b1
    h = jnp.where(h >= 0, h, alpha * h)
    y = jnp.dot(h.astype(compute_dtype), w2.astype(compute_dtype).T,
                preferred_element_type=jnp.float32) + b2
    return y.astype(x.dtype)


if __name__ == "__main__":
    key = jax.random.PRNGKey(0)
    kx, kp, kx2, kp2 = jax.random.split(key, 4)

    # Small demo shapes consistent with the module: x is [batch, in_size].
    B, in_size, hidden_size, out_size = 8, 32, 64, 16
    x = jax.random.normal(kx, (B, in_size), jnp.float32)
    w1, b1, w2, b2, alpha = init_params(kp, in_size, hidden_size, out_size)

    out = mlp_forward(x, w1, b1, w2, b2, alpha)
    out = jax.block_until_ready(out)
    ref = mlp_reference(x, w1, b1, w2, b2, alpha)
    assert out.shape == (B, out_size)
    assert jnp.allclose(out, ref, atol=2e-3, rtol=2e-3)

    # Second check: ragged batch / unaligned features -> multi-step grid and
    # padding paths are exercised.
    B2, in2, hid2, out2 = 300, 40, 96, 24
    x2 = jax.random.normal(kx2, (B2, in2), jnp.float32)
    p2 = init_params(kp2, in2, hid2, out2)
    out_2 = jax.block_until_ready(mlp_forward(x2, *p2))
    ref_2 = mlp_reference(x2, *p2)
    assert out_2.shape == (B2, out2)
    assert jnp.allclose(out_2, ref_2, atol=2e-3, rtol=2e-3)

    print("KERNEL_OK")
</pallas_src>

<mosaic_0001>
module attributes {stable_mosaic.version = 11 : i64} {
  func.func @mlp_kernel(%arg0: i32, %arg1: memref<8x128xbf16, #tpu.memory_space<vmem>>, %arg2: memref<128x128xbf16, #tpu.memory_space<vmem>>, %arg3: memref<1x128xf32, #tpu.memory_space<vmem>>, %arg4: memref<128x128xbf16, #tpu.memory_space<vmem>>, %arg5: memref<1x128xf32, #tpu.memory_space<vmem>>, %arg6: memref<1xf32, #tpu.memory_space<smem>>, %arg7: memref<8x128xf32, #tpu.memory_space<vmem>>) attributes {dimension_semantics = [#tpu.dimension_semantics<parallel>], iteration_bounds = array<i64: 1>, scalar_prefetch = 0 : i64, scratch_operands = 0 : i64, tpu.core_type = #tpu.core_type<tc>, window_params = [{transform_indices = @transform_0, window_bounds = array<i64: 8, 128>}, {pipeline_mode = #tpu.pipeline_mode<synchronous>, transform_indices = @transform_1, window_bounds = array<i64: 128, 128>}, {pipeline_mode = #tpu.pipeline_mode<synchronous>, transform_indices = @transform_2, window_bounds = array<i64: 1, 128>}, {pipeline_mode = #tpu.pipeline_mode<synchronous>, transform_indices = @transform_3, window_bounds = array<i64: 128, 128>}, {pipeline_mode = #tpu.pipeline_mode<synchronous>, transform_indices = @transform_4, window_bounds = array<i64: 1, 128>}, {transform_indices = @transform_5, window_bounds = array<i64: 1>}, {transform_indices = @transform_6, window_bounds = array<i64: 8, 128>}]} {
    %c0 = arith.constant 0 : index
    %c0_0 = arith.constant 0 : index
    %0 = vector.load %arg1[%c0, %c0_0] : memref<8x128xbf16, #tpu.memory_space<vmem>>, vector<8x128xbf16>
    %c0_1 = arith.constant 0 : index
    %c0_2 = arith.constant 0 : index
    %1 = vector.load %arg2[%c0_1, %c0_2] : memref<128x128xbf16, #tpu.memory_space<vmem>>, vector<128x128xbf16>
    %cst = arith.constant dense<0.000000e+00> : vector<8x128xf32>
    %2 = tpu.matmul %0, %1, %cst {dimension_numbers = #tpu.dot_dimension_numbers<[1], [0], [0], [1], [0, 0, 1, 1], [], []>} : vector<8x128xbf16>, vector<128x128xbf16>, vector<8x128xf32> -> vector<8x128xf32>
    %c0_3 = arith.constant 0 : index
    %c0_4 = arith.constant 0 : index
    %3 = vector.load %arg3[%c0_3, %c0_4] : memref<1x128xf32, #tpu.memory_space<vmem>>, vector<1x128xf32>
    %4 = vector.broadcast %3 : vector<1x128xf32> to vector<8x128xf32>
    %5 = arith.addf %2, %4 : vector<8x128xf32>
    %c0_5 = arith.constant 0 : index
    %6 = memref.load %arg6[%c0_5] : memref<1xf32, #tpu.memory_space<smem>>
    %cst_6 = arith.constant 0.000000e+00 : f32
    %7 = vector.broadcast %cst_6 : f32 to vector<8x128xf32>
    %8 = arith.cmpf oge, %5, %7 : vector<8x128xf32>
    %9 = vector.broadcast %6 : f32 to vector<8x128xf32>
    %10 = arith.mulf %9, %5 : vector<8x128xf32>
    %11 = arith.select %8, %5, %10 : vector<8x128xi1>, vector<8x128xf32>
    %12 = arith.truncf %11 : vector<8x128xf32> to vector<8x128xbf16>
    %c0_7 = arith.constant 0 : index
    %c0_8 = arith.constant 0 : index
    %13 = vector.load %arg4[%c0_7, %c0_8] : memref<128x128xbf16, #tpu.memory_space<vmem>>, vector<128x128xbf16>
    %cst_9 = arith.constant dense<0.000000e+00> : vector<8x128xf32>
    %14 = tpu.matmul %12, %13, %cst_9 {dimension_numbers = #tpu.dot_dimension_numbers<[1], [0], [0], [1], [0, 0, 1, 1], [], []>} : vector<8x128xbf16>, vector<128x128xbf16>, vector<8x128xf32> -> vector<8x128xf32>
    %c0_10 = arith.constant 0 : index
    %c0_11 = arith.constant 0 : index
    %15 = vector.load %arg5[%c0_10, %c0_11] : memref<1x128xf32, #tpu.memory_space<vmem>>, vector<1x128xf32>
    %16 = vector.broadcast %15 : vector<1x128xf32> to vector<8x128xf32>
    %17 = arith.addf %14, %16 : vector<8x128xf32>
    %c0_12 = arith.constant 0 : index
    %c0_13 = arith.constant 0 : index
    %18 = vector.load %arg7[%c0_12, %c0_13] : memref<8x128xf32, #tpu.memory_space<vmem>>, vector<8x128xf32>
    tpu.vector_store %arg7[%c0_12, %c0_13], %17 {strides = array<i32>} : memref<8x128xf32, #tpu.memory_space<vmem>>, vector<8x128xf32>,
    return
  }
  func.func @transform_0(%arg0: i32) -> (i32, i32) {
    %c0_i32 = arith.constant 0 : i32
    %c0_i32_0 = arith.constant 0 : i32
    return %arg0, %c0_i32 : i32, i32
  }
  func.func @transform_1(%arg0: i32) -> (i32, i32) {
    %c0_i32 = arith.constant 0 : i32
    %c0_i32_0 = arith.constant 0 : i32
    %c0_i32_1 = arith.constant 0 : i32
    return %c0_i32, %c0_i32_0 : i32, i32
  }
  func.func @transform_2(%arg0: i32) -> (i32, i32) {
    %c0_i32 = arith.constant 0 : i32
    %c0_i32_0 = arith.constant 0 : i32
    %c0_i32_1 = arith.constant 0 : i32
    return %c0_i32, %c0_i32_0 : i32, i32
  }
  func.func @transform_3(%arg0: i32) -> (i32, i32) {
    %c0_i32 = arith.constant 0 : i32
    %c0_i32_0 = arith.constant 0 : i32
    %c0_i32_1 = arith.constant 0 : i32
    return %c0_i32, %c0_i32_0 : i32, i32
  }
  func.func @transform_4(%arg0: i32) -> (i32, i32) {
    %c0_i32 = arith.constant 0 : i32
    %c0_i32_0 = arith.constant 0 : i32
    %c0_i32_1 = arith.constant 0 : i32
    return %c0_i32, %c0_i32_0 : i32, i32
  }
  func.func @transform_5(%arg0: i32) -> i32 {
    %c0_i32 = arith.constant 0 : i32
    %c0_i32_0 = arith.constant 0 : i32
    return %c0_i32 : i32
  }
  func.func @transform_6(%arg0: i32) -> (i32, i32) {
    %c0_i32 = arith.constant 0 : i32
    %c0_i32_0 = arith.constant 0 : i32
    return %arg0, %c0_i32 : i32, i32
  }
}

</mosaic_0001>

<llo_original>
// kernel: tpu_custom_call.1
$region0: #{tpu_custom_call.1}
  #allocation0 [shape = 'u32[]', space=smem, size = 0x4, offset = 0x4, fixed_abs, tag = 'smem constant byte address 0x4 - core index']
  #allocation1 [shape = 'u32[144,128]{1,0:T(1,128)}', space=vmem, size = 0x12000, scoped, tag = 'internal scratch']
  #allocation2 [shape = 'f32[1]{0:T(128)S(6)}', space=smem, size = 0x200, scoped, tag = 'scoped memory for tpu_custom_call.1']
  %s0 = inlined_call_operand.hbm [shape: bf16[8,128], index: 0, kind: input, shape index: {}]
  %s1 = inlined_call_operand.hbm [shape: bf16[128,128], index: 1, kind: input, shape index: {}]
  %s2 = inlined_call_operand.vmem [shape: f32[1,128], index: 2, kind: input, shape index: {}]
  %s3 = inlined_call_operand.hbm [shape: bf16[128,128], index: 3, kind: input, shape index: {}]
  %s4 = inlined_call_operand.vmem [shape: f32[1,128], index: 4, kind: input, shape index: {}]
  %s5 = inlined_call_operand.<no memory space> [shape: f32[1], index: 5, kind: input, shape index: {}]
  %s6 = inlined_call_operand.hbm [shape: f32[8,128], index: 6, kind: output, shape index: {}]
  %s7 = sld [smem:[#allocation0]]
  $region46: #{tpu_custom_call.1} parent=0
    _
  %s9 = ssub.s32 1, %s7
  %s10 = scalar_select 0, %s9, %s7
  %11 = sst [smem:[#allocation2]] %s5
  $region1: #{tpu_custom_call.1} parent=0
    #allocation3 [shape = 'u8[2048]{0}', space=vmem, size = 0x800, scoped, tag = 'input window, operand 0, single buffered']
    #allocation4 [shape = 's32[1]{0}', space=sflag, size = 0x4, scoped, tag = 'scoped memory for tpu_custom_call.1']
    #allocation5 [shape = 's32[1]{0}', space=sflag, size = 0x4, scoped, tag = 'scoped memory for tpu_custom_call.1']
    #allocation6 [shape = 'u8[32768]{0}', space=vmem, size = 0x8000, scoped, tag = 'input window, operand 1, single buffered']
    #allocation7 [shape = 's32[1]{0}', space=sflag, size = 0x4, scoped, tag = 'scoped memory for tpu_custom_call.1']
    #allocation8 [shape = 'u8[32768]{0}', space=vmem, size = 0x8000, scoped, tag = 'input window, operand 3, single buffered']
    #allocation9 [shape = 'u8[4096]{0}', space=vmem, size = 0x1000, scoped, tag = 'output window, operand 0, single buffered']
    %12 = vsyncpa [#allocation4], 0
    %13 = vsyncpa [#allocation7], 0
    %14 = vsyncpa [#allocation5], 0
    // Predicated region
    $region2: #{tpu_custom_call.1} parent=1 // pred_check
      _
    $region3: #{tpu_custom_call.1} parent=1 // pred_check_branch
      %16 = sbr.rel (0) target = $region5
    $region4: #{tpu_custom_call.1} parent=1 // pred_region
      %s18 = ssub.s32 64, 64
      %19 = vsyncadd [#allocation4], %s18
      %s21 = sshll.u32 [#allocation3], 4
      %s22 = int_to_ptr.vmem [resolvable:$true] %s21
      %24 = dma.hbm_to_vmem [thread:$0]  %s0, 64, %s22, [#allocation4]
    $region5: #{tpu_custom_call.1} parent=1 // pred_fallthru
      _
    // Predicated region
    $region6: #{tpu_custom_call.1} parent=1 // pred_check
      _
    $region7: #{tpu_custom_call.1} parent=1 // pred_check_branch
      %26 = sbr.rel (0) target = $region9
    $region8: #{tpu_custom_call.1} parent=1 // pred_region
      %s28 = ssub.s32 1024, 1024
      %29 = vsyncadd [#allocation7], %s28
      %s30 = sshll.u32 [#allocation6], 4
      %s31 = int_to_ptr.vmem [resolvable:$true] %s30
      %36 = dma.hbm_to_vmem [thread:$0]  %s1, 1024, %s31, [#allocation7], 64, 64, 4
    $region9: #{tpu_custom_call.1} parent=1 // pred_fallthru
      _
    // Predicated region
    $region10: #{tpu_custom_call.1} parent=1 // pred_check
      _
    $region11: #{tpu_custom_call.1} parent=1 // pred_check_branch
      %38 = sbr.rel (0) target = $region13
    $region12: #{tpu_custom_call.1} parent=1 // pred_region
      _
    $region13: #{tpu_custom_call.1} parent=1 // pred_fallthru
      _
    // Predicated region
    $region14: #{tpu_custom_call.1} parent=1 // pred_check
      _
    $region15: #{tpu_custom_call.1} parent=1 // pred_check_branch
      %40 = sbr.rel (0) target = $region17
    $region16: #{tpu_custom_call.1} parent=1 // pred_region
      %s42 = ssub.s32 1024, 1024
      %43 = vsyncadd [#allocation7], %s42
      %s44 = sshll.u32 [#allocation8], 4
      %s45 = int_to_ptr.vmem [resolvable:$true] %s44
      %50 = dma.hbm_to_vmem [thread:$0]  %s3, 1024, %s45, [#allocation7], 64, 64, 4
    $region17: #{tpu_custom_call.1} parent=1 // pred_fallthru
      _
    // Predicated region
    $region18: #{tpu_custom_call.1} parent=1 // pred_check
      _
    $region19: #{tpu_custom_call.1} parent=1 // pred_check_branch
      %52 = sbr.rel (0) target = $region21
    $region20: #{tpu_custom_call.1} parent=1 // pred_region
      _
    $region21: #{tpu_custom_call.1} parent=1 // pred_fallthru
      _
    // Predicated region
    $region22: #{tpu_custom_call.1} parent=1 // pred_check
      _
    $region23: #{tpu_custom_call.1} parent=1 // pred_check_branch
      %54 = sbr.rel (0) target = $region25
    $region24: #{tpu_custom_call.1} parent=1 // pred_region
      _
    $region25: #{tpu_custom_call.1} parent=1 // pred_fallthru
      _
    // Predicated region
    $region26: #{tpu_custom_call.1} parent=1 // pred_check
      _
    $region27: #{tpu_custom_call.1} parent=1 // pred_check_branch
      %56 = sbr.rel (0) target = $region29
    $region28: #{tpu_custom_call.1} parent=1 // pred_region
      %57 = dma.done [#allocation4], 64
    $region29: #{tpu_custom_call.1} parent=1 // pred_fallthru
      _
    // Predicated region
    $region30: #{tpu_custom_call.1} parent=1 // pred_check
      _
    $region31: #{tpu_custom_call.1} parent=1 // pred_check_branch
      %59 = sbr.rel (0) target = $region33
    $region32: #{tpu_custom_call.1} parent=1 // pred_region
      %60 = dma.done [#allocation7], 1024
    $region33: #{tpu_custom_call.1} parent=1 // pred_fallthru
      _
    // Predicated region
    $region34: #{tpu_custom_call.1} parent=1 // pred_check
      _
    $region35: #{tpu_custom_call.1} parent=1 // pred_check_branch
      %62 = sbr.rel (0) target = $region37
    $region36: #{tpu_custom_call.1} parent=1 // pred_region
      %63 = dma.done [#allocation7], 1024
    $region37: #{tpu_custom_call.1} parent=1 // pred_fallthru
      _
    %v65 = vld [vmem:[#allocation3] sm:$0xf]
    %v66 = vld [vmem:[#allocation6] sm:$0xf]
    %v67 = vld [vmem:[#allocation6 + $0x4] sm:$0xf]
    %v68 = vld [vmem:[#allocation6 + $0x8] sm:$0xf]
    %v69 = vld [vmem:[#allocation6 + $0xc] sm:$0xf]
    %v70 = vld [vmem:[#allocation6 + $0x10] sm:$0xf]
    %v71 = vld [vmem:[#allocation6 + $0x14] sm:$0xf]
    %v72 = vld [vmem:[#allocation6 + $0x18] sm:$0xf]
    %v73 = vld [vmem:[#allocation6 + $0x1c] sm:$0xf]
    %v74 = vld [vmem:[#allocation6 + $0x20] sm:$0xf]
    %v75 = vld [vmem:[#allocation6 + $0x24] sm:$0xf]
    %v76 = vld [vmem:[#allocation6 + $0x28] sm:$0xf]
    %v77 = vld [vmem:[#allocation6 + $0x2c] sm:$0xf]
    %v78 = vld [vmem:[#allocation6 + $0x30] sm:$0xf]
    %v79 = vld [vmem:[#allocation6 + $0x34] sm:$0xf]
    %v80 = vld [vmem:[#allocation6 + $0x38] sm:$0xf]
    %v81 = vld [vmem:[#allocation6 + $0x3c] sm:$0xf]
    %v82 = vld [vmem:[%s2] sm:$0x1]
    %v84 = vlaneseq
    %v85 = vshrl.u32 %v84, 7
    %v86 = vsub.s32 0, %v85
    %v87 = vrot.slane %v82, %v86
    %v105 = vunpack.c.l.b16 %v66
    %v106 = vunpack.c.l.b16 %v67
    %v107 = vunpack.c.l.b16 %v68
    %v108 = vunpack.c.l.b16 %v69
    %v109 = vunpack.c.l.b16 %v70
    %v110 = vunpack.c.l.b16 %v71
    %v111 = vunpack.c.l.b16 %v72
    %v112 = vunpack.c.l.b16 %v73
    %v113 = vunpack.c.l.b16 %v74
    %v114 = vunpack.c.l.b16 %v75
    %v115 = vunpack.c.l.b16 %v76
    %v116 = vunpack.c.l.b16 %v77
    %v117 = vunpack.c.l.b16 %v78
    %v118 = vunpack.c.l.b16 %v79
    %v119 = vunpack.c.l.b16 %v80
    %v120 = vunpack.c.l.b16 %v81
    %v121 = vpack.c.b16 %v106, %v105
    %v122 = vpack.c.b16 %v108, %v107
    %v123 = vpack.c.b16 %v110, %v109
    %v124 = vpack.c.b16 %v112, %v111
    %v125 = vpack.c.b16 %v114, %v113
    %v126 = vpack.c.b16 %v116, %v115
    %v127 = vpack.c.b16 %v118, %v117
    %v128 = vpack.c.b16 %v120, %v119
    %137 = vmatprep.subr.bf16.mxu0 0
    %138 = vmatpush1.bf16.msra.mxu0 %v128
    %139 = vmatprep.subr.bf16.mxu0 0
    %140 = vmatpush1.bf16.msra.mxu0 %v127
    %141 = vmatprep.subr.bf16.mxu0 0
    %142 = vmatpush1.bf16.msra.mxu0 %v126
    %143 = vmatprep.subr.bf16.mxu0 0
    %144 = vmatpush1.bf16.msra.mxu0 %v125
    %145 = vmatprep.subr.bf16.mxu0 0
    %146 = vmatpush1.bf16.msra.mxu0 %v124
    %147 = vmatprep.subr.bf16.mxu0 0
    %148 = vmatpush1.bf16.msra.mxu0 %v123
    %149 = vmatprep.subr.bf16.mxu0 0
    %150 = vmatpush1.bf16.msra.mxu0 %v122
    %151 = vmatprep.subr.bf16.mxu0 0
    %152 = vmatpush1.bf16.msra.mxu0 %v121
    %153 = vmatprep.subr.bf16.mxu0 0
    %154 = vmatpush2.bf16.msra.mxu0 0
    %155 = vmatprep.subr.bf16.mxu0 0
    %156 = vmatpush2.bf16.msra.mxu0 0
    %157 = vmatprep.subr.bf16.mxu0 0
    %158 = vmatpush2.bf16.msra.mxu0 0
    %159 = vmatprep.subr.bf16.mxu0 0
    %160 = vmatpush2.bf16.msra.mxu0 0
    %161 = vmatprep.subr.bf16.mxu0 0
    %162 = vmatpush2.bf16.msra.mxu0 0
    %163 = vmatprep.subr.bf16.mxu0 0
    %164 = vmatpush2.bf16.msra.mxu0 0
    %165 = vmatprep.subr.bf16.mxu0 0
    %166 = vmatpush2.bf16.msra.mxu0 0
    %167 = vmatprep.subr.bf16.mxu0 0
    %168 = vmatpush2.bf16.msra.mxu0 0
    %169 = vmatprep.mubr.bf16.mxu0 0
    %170 = vmatmul.mubr.bf16.gmra.mxu0 %v65
    %v171 = vpop.f32.mrf.mxu0
    %v172 = vadd.f32 %v87, %v171
    %v173 = vpop.f32.mrf.mxu0
    %v174 = vpop.f32.mrf.mxu0
    %v175 = vpop.f32.mrf.mxu0
    %176 = vdwg.mxu0
    %s177 = sld [smem:[#allocation2]]
    %vm178 = vcmp.ge.f32.partialorder %v172, 0.0
    %v179 = vstv %s177
    %v180 = vmul.f32 %v179, %v172
    %v181 = vsel %vm178, %v172, %v180
    %v182 = vpack.c.bf16 %v181, %v181
    %v183 = vld [vmem:[#allocation8] sm:$0xf]
    %v184 = vld [vmem:[#allocation8 + $0x4] sm:$0xf]
    %v185 = vld [vmem:[#allocation8 + $0x8] sm:$0xf]
    %v186 = vld [vmem:[#allocation8 + $0xc] sm:$0xf]
    %v187 = vld [vmem:[#allocation8 + $0x10] sm:$0xf]
    %v188 = vld [vmem:[#allocation8 + $0x14] sm:$0xf]
    %v189 = vld [vmem:[#allocation8 + $0x18] sm:$0xf]
    %v190 = vld [vmem:[#allocation8 + $0x1c] sm:$0xf]
    %v191 = vld [vmem:[#allocation8 + $0x20] sm:$0xf]
    %v192 = vld [vmem:[#allocation8 + $0x24] sm:$0xf]
    %v193 = vld [vmem:[#allocation8 + $0x28] sm:$0xf]
    %v194 = vld [vmem:[#allocation8 + $0x2c] sm:$0xf]
    %v195 = vld [vmem:[#allocation8 + $0x30] sm:$0xf]
    %v196 = vld [vmem:[#allocation8 + $0x34] sm:$0xf]
    %v197 = vld [vmem:[#allocation8 + $0x38] sm:$0xf]
    %v198 = vld [vmem:[#allocation8 + $0x3c] sm:$0xf]
    %v199 = vld [vmem:[%s4] sm:$0x1]
    %v201 = vlaneseq
    %v202 = vshrl.u32 %v201, 7
    %v203 = vsub.s32 0, %v202
    %v204 = vrot.slane %v199, %v203
    %v222 = vunpack.c.l.b16 %v183
    %v223 = vunpack.c.l.b16 %v184
    %v224 = vunpack.c.l.b16 %v185
    %v225 = vunpack.c.l.b16 %v186
    %v226 = vunpack.c.l.b16 %v187
    %v227 = vunpack.c.l.b16 %v188
    %v228 = vunpack.c.l.b16 %v189
    %v229 = vunpack.c.l.b16 %v190
    %v230 = vunpack.c.l.b16 %v191
    %v231 = vunpack.c.l.b16 %v192
    %v232 = vunpack.c.l.b16 %v193
    %v233 = vunpack.c.l.b16 %v194
    %v234 = vunpack.c.l.b16 %v195
    %v235 = vunpack.c.l.b16 %v196
    %v236 = vunpack.c.l.b16 %v197
    %v237 = vunpack.c.l.b16 %v198
    %v238 = vpack.c.b16 %v223, %v222
    %v239 = vpack.c.b16 %v225, %v224
    %v240 = vpack.c.b16 %v227, %v226
    %v241 = vpack.c.b16 %v229, %v228
    %v242 = vpack.c.b16 %v231, %v230
    %v243 = vpack.c.b16 %v233, %v232
    %v244 = vpack.c.b16 %v235, %v234
    %v245 = vpack.c.b16 %v237, %v236
    %254 = vmatprep.subr.bf16.mxu0 0
    %255 = vmatpush1.bf16.msra.mxu0 %v245
    %256 = vmatprep.subr.bf16.mxu0 0
    %257 = vmatpush1.bf16.msra.mxu0 %v244
    %258 = vmatprep.subr.bf16.mxu0 0
    %259 = vmatpush1.bf16.msra.mxu0 %v243
    %260 = vmatprep.subr.bf16.mxu0 0
    %261 = vmatpush1.bf16.msra.mxu0 %v242
    %262 = vmatprep.subr.bf16.mxu0 0
    %263 = vmatpush1.bf16.msra.mxu0 %v241
    %264 = vmatprep.subr.bf16.mxu0 0
    %265 = vmatpush1.bf16.msra.mxu0 %v240
    %266 = vmatprep.subr.bf16.mxu0 0
    %267 = vmatpush1.bf16.msra.mxu0 %v239
    %268 = vmatprep.subr.bf16.mxu0 0
    %269 = vmatpush1.bf16.msra.mxu0 %v238
    %270 = vmatprep.subr.bf16.mxu0 0
    %271 = vmatpush2.bf16.msra.mxu0 0
    %272 = vmatprep.subr.bf16.mxu0 0
    %273 = vmatpush2.bf16.msra.mxu0 0
    %274 = vmatprep.subr.bf16.mxu0 0
    %275 = vmatpush2.bf16.msra.mxu0 0
    %276 = vmatprep.subr.bf16.mxu0 0
    %277 = vmatpush2.bf16.msra.mxu0 0
    %278 = vmatprep.subr.bf16.mxu0 0
    %279 = vmatpush2.bf16.msra.mxu0 0
    %280 = vmatprep.subr.bf16.mxu0 0
    %281 = vmatpush2.bf16.msra.mxu0 0
    %282 = vmatprep.subr.bf16.mxu0 0
    %283 = vmatpush2.bf16.msra.mxu0 0
    %284 = vmatprep.subr.bf16.mxu0 0
    %285 = vmatpush2.bf16.msra.mxu0 0
    %286 = vmatprep.mubr.bf16.mxu0 0
    %287 = vmatmul.mubr.bf16.gmra.mxu0 %v182
    %v288 = vpop.f32.mrf.mxu0
    %v289 = vadd.f32 %v204, %v288
    %v290 = vpop.f32.mrf.mxu0
    %v291 = vpop.f32.mrf.mxu0
    %v292 = vpop.f32.mrf.mxu0
    %293 = vdwg.mxu0
    %294 = vst [vmem:[#allocation9] sm:$0xff] %v289
    // Predicated region
    $region38: #{tpu_custom_call.1} parent=1 // pred_check
      _
    $region39: #{tpu_custom_call.1} parent=1 // pred_check_branch
      %296 = sbr.rel (0) target = $region41
    $region40: #{tpu_custom_call.1} parent=1 // pred_region
      %s298 = ssub.s32 128, 128
      %299 = vsyncadd [#allocation5], %s298
      %s301 = sshll.u32 [#allocation9], 4
      %s302 = int_to_ptr.vmem [resolvable:$true] %s301
      %304 = dma.vmem_to_hbm [thread:$0]  %s302, 128, %s6, [#allocation5]
    $region41: #{tpu_custom_call.1} parent=1 // pred_fallthru
      _
    // Predicated region
    $region42: #{tpu_custom_call.1} parent=1 // pred_check
      _
    $region43: #{tpu_custom_call.1} parent=1 // pred_check_branch
      %306 = sbr.rel (0) target = $region45
    $region44: #{tpu_custom_call.1} parent=1 // pred_region
      %307 = dma.done [#allocation5], 128
    $region45: #{tpu_custom_call.1} parent=1 // pred_fallthru
      _
    %308 = vsyncpa [#allocation4], 1
    %309 = vsyncpa [#allocation7], 1
    %310 = vsyncpa [#allocation5], 1

</llo_original>
